<compile_context>
chip_gen: v7x
topology: tpu7x:2x2x1
jax: 0.10.0
libtpu: 0.0.40
codegen_flags: <defaults>
</compile_context>

<pallas_src>
import functools

import jax
import jax.numpy as jnp
from jax.experimental import pallas as pl
from jax.experimental.pallas import tpu as pltpu

LANES = 128
SUBLANES = 8
_PALLAS_MIN_ELEMS = 1 << 15     # below this, a fused XLA elementwise op wins


def _round_up(x: int, m: int) -> int:
    return ((x + m - 1) // m) * m


@functools.lru_cache(maxsize=1)
def _tile_byte_budget() -> int:
    """Per-tile byte budget chosen per TPU generation (conservative default)."""
    try:
        kind = jax.devices()[0].device_kind.lower()
    except Exception:  # pragma: no cover - defensive
        kind = ""
    if "v7" in kind:
        # 4 MiB tile -> 4 double-buffered in+out tiles = 16 MiB << 64 MiB VMEM.
        return 4 << 20
    if "v6" in kind:
        # Measured streaming sweep: 4 MiB+ tiles reach ~86-90% of roofline.
        return 6 << 20
    if "v5e" in kind or "v5 lite" in kind or "v5litepod" in kind:
        # Keep 4 buffers under v5e's 16 MiB scoped-VMEM default.
        return 2 << 20
    return 2 << 20  # unknown / older chips: safe everywhere


def _pact_kernel(s_ref, x_ref, o_ref):
    # s_ref: SMEM (3,) f32 = [alpha, scale, inv_scale]; x_ref/o_ref: VMEM tiles.
    alpha = s_ref[0]
    scale = s_ref[1]        # (2^nbit - 1) / alpha, precomputed in the wrapper
    inv_scale = s_ref[2]    # alpha / (2^nbit - 1): scalar mul instead of vec div
    x = x_ref[...].astype(jnp.float32)          # in-kernel cast (free, mem-bound)
    clamped = jnp.minimum(jnp.maximum(x, 0.0), alpha)
    # round-half-to-even matches torch.round; do NOT use floor(x + 0.5)
    o_ref[...] = (jnp.round(scale * clamped) * inv_scale).astype(o_ref.dtype)


def _pact_jax(inp, nbit_a, alpha):
    """Pure-JAX fast path for tiny tensors (also used as reference)."""
    alpha = jnp.asarray(alpha, jnp.float32)
    x = jnp.clip(inp.astype(jnp.float32), 0.0, alpha)
    scale = (2 ** nbit_a - 1) / alpha
    return (jnp.round(scale * x) / scale).astype(inp.dtype)


def pact_forward(inp: jax.Array, nbit_a: int, alpha,
                 *, block_rows: int | None = None,
                 use_pallas: bool | None = None) -> jax.Array:
    """PACT forward. `inp` is any-shaped float activation (e.g. NCHW),
    `nbit_a` is a static python int, `alpha` is a scalar (learnable in torch).
    Note: alpha <= 0 yields inf/NaN scale, same as the torch reference."""
    if nbit_a == 32:
        return inp

    n = inp.size
    if use_pallas is None:
        use_pallas = n >= _PALLAS_MIN_ELEMS
    if not use_pallas:
        # Kernel-launch overhead dwarfs the work for tiny activations.
        return _pact_jax(inp, nbit_a, alpha)

    orig_shape = inp.shape
    dtype = inp.dtype
    itemsize = jnp.dtype(dtype).itemsize
    levels = float(2 ** nbit_a - 1)

    flat = inp.reshape(-1)
    # Only LANES alignment is required for the (rows, 128) view; Pallas clips
    # the partial last row-block, so no 8/16-row alignment of the array.
    pad = (-n) % LANES
    if pad:
        # TODO(synk): misaligned sizes still pay one wrapper pad copy (<=127
        # pad elems); handling the tail in-kernel would remove it entirely.
        flat = jnp.pad(flat, (0, pad))
    rows = flat.shape[0] // LANES
    x2d = flat.reshape(rows, LANES)

    # Packed-sublane multiple of the dtype: 8 for f32, 16 for bf16/f16, 32 for
    # 8-bit.  Keeps sub-32-bit stores unmasked.
    sub_mult = max(SUBLANES, 32 // itemsize)

    if block_rows is None:
        # Byte-budgeted tile: same fraction of HBM roofline for every dtype.
        block_rows = max(sub_mult, _tile_byte_budget() // (LANES * itemsize))
    br = _round_up(block_rows, sub_mult)
    br = min(br, _round_up(rows, sub_mult))
    # Guarantee >= 2 grid blocks when splittable so the "parallel" axis can
    # shard across v7x's two TensorCores (and keep the two halves balanced).
    if pl.cdiv(rows, br) < 2 and rows >= 2 * sub_mult:
        br = _round_up(pl.cdiv(rows, 2), sub_mult)
    grid = (pl.cdiv(rows, br),)

    # Explicit VMEM budget: in+out, double-buffered, plus headroom.
    tile_bytes = br * LANES * itemsize
    vmem_limit = int(min(4 * tile_bytes + (4 << 20), 48 << 20))

    alpha_f = jnp.asarray(alpha, jnp.float32).reshape(())
    scalars = jnp.stack([alpha_f, levels / alpha_f, alpha_f / levels])

    out2d = pl.pallas_call(
        _pact_kernel,
        out_shape=jax.ShapeDtypeStruct((rows, LANES), dtype),
        grid_spec=pltpu.PrefetchScalarGridSpec(
            num_scalar_prefetch=0,
            grid=grid,
            in_specs=[
                pl.BlockSpec(memory_space=pltpu.MemorySpace.SMEM),  # scalars
                pl.BlockSpec((br, LANES), lambda i: (i, 0)),        # x tile
            ],
            out_specs=pl.BlockSpec((br, LANES), lambda i: (i, 0)),
        ),
        compiler_params=pltpu.CompilerParams(
            # Single parallel axis -> shards row-tiles across v7x's 2 TCs;
            # measured ~0 impact on v5e/v6e.
            dimension_semantics=("parallel",),
            vmem_limit_bytes=vmem_limit,
        ),
    )(scalars, x2d)

    out_flat = out2d.reshape(-1)
    if pad:
        out_flat = out_flat[:n]
    return out_flat.reshape(orig_shape)


if __name__ == "__main__":
    key = jax.random.PRNGKey(0)
    alpha = jnp.asarray(6.0, dtype=jnp.float32)
    nbit_a = 4

    # 1) Spec shape (2, 4, 16, 16) NCHW — force the Pallas path so the kernel
    #    itself is exercised (16 rows -> split into a 2-block grid).
    x = jax.random.normal(key, (2, 4, 16, 16), dtype=jnp.float32) * 2.0
    out = jax.block_until_ready(pact_forward(x, nbit_a, alpha, use_pallas=True))
    ref = _pact_jax(x, nbit_a, alpha)
    assert out.shape == x.shape and out.dtype == x.dtype
    assert jnp.allclose(out, ref, atol=1e-5), "mismatch vs reference (spec shape)"

    # 2) Larger activation, byte-budgeted auto tiling (>= 2 blocks).
    k2 = jax.random.PRNGKey(1)
    x2 = jax.random.normal(k2, (4, 32, 56, 56), dtype=jnp.float32) * 3.0
    out2 = jax.block_until_ready(pact_forward(x2, nbit_a, alpha, use_pallas=True))
    ref2 = _pact_jax(x2, nbit_a, alpha)
    assert jnp.allclose(out2, ref2, atol=1e-5), "mismatch vs reference (large/auto)"

    # 2b) Same activation with an explicit block_rows -> multi-step grid with a
    #     partial last block (3136 rows, block 1024 -> grid=4, last block 64).
    out2b = jax.block_until_ready(
        pact_forward(x2, nbit_a, alpha, block_rows=1024, use_pallas=True))
    assert jnp.allclose(out2b, ref2, atol=1e-5), "mismatch vs reference (partial block)"

    # 3) Non-128-aligned element count -> exercises the small tail pad.
    k3 = jax.random.PRNGKey(2)
    x3 = jax.random.normal(k3, (2, 3, 7, 16), dtype=jnp.float32) * 2.0
    out3 = jax.block_until_ready(pact_forward(x3, nbit_a, alpha, use_pallas=True))
    ref3 = _pact_jax(x3, nbit_a, alpha)
    assert jnp.allclose(out3, ref3, atol=1e-5), "mismatch vs reference (ragged)"

    # 4) bf16 activations: native-dtype in/out, 16-row sublane-packed tiles,
    #    cast handled inside the kernel.
    x4 = x2.astype(jnp.bfloat16)
    out4 = jax.block_until_ready(pact_forward(x4, nbit_a, alpha, use_pallas=True))
    assert out4.dtype == jnp.bfloat16
    ref4 = _pact_jax(x4, nbit_a, alpha)
    assert jnp.allclose(out4.astype(jnp.float32), ref4.astype(jnp.float32),
                        atol=5e-2), "mismatch vs reference (bf16)"

    # 5) nbit==32 passthrough and the tiny-tensor auto fast path.
    out32 = jax.block_until_ready(pact_forward(x, 32, alpha))
    assert jnp.array_equal(out32, x)
    out_fast = jax.block_until_ready(pact_forward(x, nbit_a, alpha))  # auto: JAX path
    assert jnp.allclose(out_fast, ref, atol=1e-5)

    print("KERNEL_OK")
</pallas_src>

<mosaic_0001>
module attributes {stable_mosaic.version = 11 : i64} {
  func.func @_pact_kernel(%arg0: i32, %arg1: memref<3xf32, #tpu.memory_space<smem>>, %arg2: memref<8x128xf32, #tpu.memory_space<vmem>>, %arg3: memref<8x128xf32, #tpu.memory_space<vmem>>) attributes {dimension_semantics = [#tpu.dimension_semantics<parallel>], iteration_bounds = array<i64: 2>, scalar_prefetch = 0 : i64, scratch_operands = 0 : i64, tpu.core_type = #tpu.core_type<tc>, window_params = [{transform_indices = @transform_0, window_bounds = array<i64: 3>}, {transform_indices = @transform_1, window_bounds = array<i64: 8, 128>}, {transform_indices = @transform_2, window_bounds = array<i64: 8, 128>}]} {
    %c0 = arith.constant 0 : index
    %0 = memref.load %arg1[%c0] : memref<3xf32, #tpu.memory_space<smem>>
    %c1 = arith.constant 1 : index
    %1 = memref.load %arg1[%c1] : memref<3xf32, #tpu.memory_space<smem>>
    %c2 = arith.constant 2 : index
    %2 = memref.load %arg1[%c2] : memref<3xf32, #tpu.memory_space<smem>>
    %c0_0 = arith.constant 0 : index
    %c0_1 = arith.constant 0 : index
    %3 = vector.load %arg2[%c0_0, %c0_1] : memref<8x128xf32, #tpu.memory_space<vmem>>, vector<8x128xf32>
    %cst = arith.constant 0.000000e+00 : f32
    %4 = vector.broadcast %cst : f32 to vector<8x128xf32>
    %5 = arith.maximumf %3, %4 : vector<8x128xf32>
    %6 = vector.broadcast %0 : f32 to vector<8x128xf32>
    %7 = arith.minimumf %5, %6 : vector<8x128xf32>
    %8 = vector.broadcast %1 : f32 to vector<8x128xf32>
    %9 = arith.mulf %8, %7 : vector<8x128xf32>
    %10 = math.roundeven %9 : vector<8x128xf32>
    %11 = vector.broadcast %2 : f32 to vector<8x128xf32>
    %12 = arith.mulf %10, %11 : vector<8x128xf32>
    %c0_2 = arith.constant 0 : index
    %c0_3 = arith.constant 0 : index
    %13 = vector.load %arg3[%c0_2, %c0_3] : memref<8x128xf32, #tpu.memory_space<vmem>>, vector<8x128xf32>
    tpu.vector_store %arg3[%c0_2, %c0_3], %12 {strides = array<i32>} : memref<8x128xf32, #tpu.memory_space<vmem>>, vector<8x128xf32>,
    return
  }
  func.func @transform_0(%arg0: i32) -> i32 {
    %c0_i32 = arith.constant 0 : i32
    %c0_i32_0 = arith.constant 0 : i32
    return %c0_i32 : i32
  }
  func.func @transform_1(%arg0: i32) -> (i32, i32) {
    %c0_i32 = arith.constant 0 : i32
    %c0_i32_0 = arith.constant 0 : i32
    return %arg0, %c0_i32 : i32, i32
  }
  func.func @transform_2(%arg0: i32) -> (i32, i32) {
    %c0_i32 = arith.constant 0 : i32
    %c0_i32_0 = arith.constant 0 : i32
    return %arg0, %c0_i32 : i32, i32
  }
}

</mosaic_0001>

<llo_original>
// kernel: tpu_custom_call.1
$region0: #{tpu_custom_call.1}
  #allocation0 [shape = 'u32[]', space=smem, size = 0x4, offset = 0x4, fixed_abs, tag = 'smem constant byte address 0x4 - core index']
  #allocation1 [shape = 'u32[144,128]{1,0:T(1,128)}', space=vmem, size = 0x12000, scoped, tag = 'internal scratch']
  %s0 = inlined_call_operand.hbm [shape: f32[3], index: 0, kind: input, shape index: {}]
  %s1 = inlined_call_operand.hbm [shape: f32[16,128], index: 1, kind: input, shape index: {}]
  %s2 = inlined_call_operand.hbm [shape: f32[16,128], index: 2, kind: output, shape index: {}]
  %s3 = sld [smem:[#allocation0]]
  $region49: #{tpu_custom_call.1} parent=0
    _
  %s5 = ssub.s32 1, %s3
  %s6 = scalar_select 0, %s5, %s3
  $region1: #{tpu_custom_call.1} parent=0
    #allocation2 [shape = 'u8[512]{0}', space=smem, size = 0x200, scoped, tag = 'input window, operand 0, single buffered']
    #allocation3 [shape = 's32[2]{0}', space=sflag, size = 0x8, scoped, tag = 'scoped memory for tpu_custom_call.1']
    #allocation4 [shape = 's32[2]{0}', space=sflag, size = 0x8, scoped, tag = 'scoped memory for tpu_custom_call.1']
    #allocation5 [shape = 's32[2]{0}', space=sflag, size = 0x8, scoped, tag = 'scoped memory for tpu_custom_call.1']
    #allocation6 [shape = 'u8[8192]{0}', space=vmem, size = 0x2000, scoped, tag = 'input window, operand 1']
    #allocation7 [shape = 'u8[8192]{0}', space=vmem, size = 0x2000, scoped, tag = 'output window, operand 0']
    %7 = vsyncpa [#allocation5], 0
    %8 = vsyncpa [#allocation3], 0
    %s9 = scalar_lea.sflag [#allocation3], 1
    %10 = vsyncpa %s9, 0
    %11 = vsyncpa [#allocation4], 0
    %s12 = scalar_lea.sflag [#allocation4], 1
    %13 = vsyncpa %s12, 0
    loop: start=0, step=1, limit=4
    $region2: #{tpu_custom_call.1} parent=1 // loop_pre_header
      _
    $region3: #{tpu_custom_call.1} parent=1 // loop_header
      %s15 = sphi 0, %s19
      %p16 = scmp.ge.s32.totalorder %s15, 4
      %s23 = sphi 0, %s23
      %s25 = sphi 0, %s23
      %s26 = sphi 0, %s25
      %s40 = sphi 0, %s26
      %s46 = sphi 0, %s48
      %s49 = sphi 0, %s46
      %s50 = sphi 0, %s49
      %s66 = sphi 0, %s50
      %s72 = sphi 0, %s74
      %s75 = sphi 0, %s72
      %s76 = sphi 0, %s75
      %s92 = sphi 0, %s76
    $region4: #{tpu_custom_call.1} parent=1 // loop_header_branch
      %18 = sbr.rel (%p16) target = $region8
    $region5: #{tpu_custom_call.1} parent=1 // loop_body
      %s20 = ssub.s32 %s15, 1
      %s21 = ssub.s32 %s15, 2
      %s22 = sadd.s32 %s15, 1
      %s24 = sadd.s32 %s23, 1
      %p27 = scmp.eq.s32.totalorder %s15, 1
      %p28 = scmp.ne.s32.totalorder %s23, %s25
      %p29 = scmp.eq.s32.totalorder %s15, 0
      %p30 = por %p28, %p29
      %p31 = scmp.ne.s32.totalorder %s23, %s25
      %p32 = scmp.eq.s32.totalorder %s20, 1
      %p33 = por %p31, %p32
      %p34 = scmp.ne.s32.totalorder %s25, %s26
      %p35 = scmp.eq.s32.totalorder %s20, 0
      %p36 = por %p34, %p35
      %p37 = scmp.ne.s32.totalorder %s25, %s26
      %p38 = scmp.eq.s32.totalorder %s21, 1
      %p39 = por %p37, %p38
      %p41 = scmp.ne.s32.totalorder %s26, %s40
      %p42 = scmp.eq.s32.totalorder %s21, 0
      %p43 = por %p41, %p42
      %s44 = ssub.s32 %s15, %s22
      %p45 = scmp.eq.s32.totalorder %s44, 0
      %s47 = sadd.s32 %s46, 1
      %s48 = scalar_select %p45, %s46, %s47
      %p51 = pneg %p45
      %p52 = scmp.eq.s32.totalorder %s15, 1
      %p53 = por %p51, %p52
      %p54 = scmp.ne.s32.totalorder %s46, %s49
      %p55 = scmp.eq.s32.totalorder %s15, 0
      %p56 = por %p54, %p55
      %p57 = scmp.ne.s32.totalorder %s46, %s49
      %p58 = scmp.eq.s32.totalorder %s20, 1
      %p59 = por %p57, %p58
      %p60 = scmp.ne.s32.totalorder %s49, %s50
      %p61 = scmp.eq.s32.totalorder %s20, 0
      %p62 = por %p60, %p61
      %p63 = scmp.ne.s32.totalorder %s49, %s50
      %p64 = scmp.eq.s32.totalorder %s21, 1
      %p65 = por %p63, %p64
      %p67 = scmp.ne.s32.totalorder %s50, %s66
      %p68 = scmp.eq.s32.totalorder %s21, 0
      %p69 = por %p67, %p68
      %s70 = ssub.s32 %s15, %s22
      %p71 = scmp.eq.s32.totalorder %s70, 0
      %s73 = sadd.s32 %s72, 1
      %s74 = scalar_select %p71, %s72, %s73
      %p77 = pneg %p71
      %p78 = scmp.eq.s32.totalorder %s15, 1
      %p79 = por %p77, %p78
      %p80 = scmp.ne.s32.totalorder %s72, %s75
      %p81 = scmp.eq.s32.totalorder %s15, 0
      %p82 = por %p80, %p81
      %p83 = scmp.ne.s32.totalorder %s72, %s75
      %p84 = scmp.eq.s32.totalorder %s20, 1
      %p85 = por %p83, %p84
      %p86 = scmp.ne.s32.totalorder %s75, %s76
      %p87 = scmp.eq.s32.totalorder %s20, 0
      %p88 = por %p86, %p87
      %p89 = scmp.ne.s32.totalorder %s75, %s76
      %p90 = scmp.eq.s32.totalorder %s21, 1
      %p91 = por %p89, %p90
      %p93 = scmp.ne.s32.totalorder %s76, %s92
      %p94 = scmp.eq.s32.totalorder %s21, 0
      %p95 = por %p93, %p94
      %p96 = scmp.le.s32.totalorder 1, %s15
      %p97 = scmp.lt.s32.totalorder %s15, 3
      %p98 = pnand %p96, %p97
      %p99 = pneg %p98
      // Predicated region
      $region9: #{tpu_custom_call.1} parent=5 // pred_check
        _
      $region10: #{tpu_custom_call.1} parent=5 // pred_check_branch
        %101 = sbr.rel (%p98) target = $region12
      $region11: #{tpu_custom_call.1} parent=5 // pred_region
        %s102 = ssub.s32 %s15, 1
        // Predicated region
        $region13: #{tpu_custom_call.1} parent=11 // pred_check
          %p103 = pneg %p36
        $region14: #{tpu_custom_call.1} parent=11 // pred_check_branch
          %105 = sbr.rel (%p103) target = $region16
        $region15: #{tpu_custom_call.1} parent=11 // pred_region
          %s107 = ssub.s32 16, 16
          %108 = vsyncadd [#allocation5], %s107
          %111 = dma.hbm_to_smem %s0, 16, [#allocation2], [#allocation5]
        $region16: #{tpu_custom_call.1} parent=11 // pred_fallthru
          _
      $region12: #{tpu_custom_call.1} parent=5 // pred_fallthru
        _
      %p112 = scmp.lt.s32.totalorder %s15, 2
      // Predicated region
      $region17: #{tpu_custom_call.1} parent=5 // pred_check
        %p113 = pneg %p112
      $region18: #{tpu_custom_call.1} parent=5 // pred_check_branch
        %115 = sbr.rel (%p113) target = $region20
      $region19: #{tpu_custom_call.1} parent=5 // pred_region
        // Predicated region
        $region21: #{tpu_custom_call.1} parent=19 // pred_check
          %p116 = pneg %p56
        $region22: #{tpu_custom_call.1} parent=19 // pred_check_branch
          %118 = sbr.rel (%p116) target = $region24
        $region23: #{tpu_custom_call.1} parent=19 // pred_region
          %s119 = sand.u32 %s46, 1
          %s120 = scalar_lea.sflag [#allocation3], %s119
          %s121 = sand.u32 %s46, 1
          %s122 = smul.addr %s121, 8
          %s123 = scalar_lea.vmem [#allocation6], %s122
          %s125 = ssub.s32 128, 128
          %126 = vsyncadd %s120, %s125
          %s127 = smul.addr %s15, 128
          %s128 = scalar_lea.hbm %s1, %s127
          %s130 = sshll.u32 %s123, 4
          %s131 = int_to_ptr.vmem [resolvable:$true] %s130
          %133 = dma.hbm_to_vmem [thread:$0]  %s128, 128, %s131, %s120
        $region24: #{tpu_custom_call.1} parent=19 // pred_fallthru
          _
      $region20: #{tpu_custom_call.1} parent=5 // pred_fallthru
        _
      %p134 = scmp.le.s32.totalorder 1, %s15
      %p135 = scmp.lt.s32.totalorder %s15, 3
      %p136 = pnand %p134, %p135
      %p137 = pneg %p136
      // Predicated region
      $region25: #{tpu_custom_call.1} parent=5 // pred_check
        _
      $region26: #{tpu_custom_call.1} parent=5 // pred_check_branch
        %139 = sbr.rel (%p136) target = $region28
      $region27: #{tpu_custom_call.1} parent=5 // pred_region
        %s140 = ssub.s32 %s15, 1
        // Predicated region
        $region29: #{tpu_custom_call.1} parent=27 // pred_check
          %p141 = pneg %p36
        $region30: #{tpu_custom_call.1} parent=27 // pred_check_branch
          %143 = sbr.rel (%p141) target = $region32
        $region31: #{tpu_custom_call.1} parent=27 // pred_region
          %144 = dma.done [#allocation5], 16
        $region32: #{tpu_custom_call.1} parent=27 // pred_fallthru
          _
        %s145 = sand.u32 %s49, 1
        %s146 = scalar_lea.sflag [#allocation3], %s145
        %s147 = sand.u32 %s49, 1
        %s148 = smul.addr %s147, 8
        %s149 = scalar_lea.vmem [#allocation6], %s148
        // Predicated region
        $region33: #{tpu_custom_call.1} parent=27 // pred_check
          %p150 = pneg %p62
        $region34: #{tpu_custom_call.1} parent=27 // pred_check_branch
          %152 = sbr.rel (%p150) target = $region36
        $region35: #{tpu_custom_call.1} parent=27 // pred_region
          %153 = dma.done %s146, 128
        $region36: #{tpu_custom_call.1} parent=27 // pred_fallthru
          _
        %154 = sfence
        %p155 = pneg %p36
        %p156 = pneg %p33
        %s157 = sand.u32 %s49, 1
        %s158 = scalar_lea.sflag [#allocation3], %s157
        %s159 = sand.u32 %s49, 1
        %s160 = smul.addr %s159, 8
        %s161 = scalar_lea.vmem [#allocation6], %s160
        %p162 = pneg %p62
        %p163 = pneg %p59
        %p164 = pneg %p88
        %p165 = pneg %p85
        %s166 = sand.u32 %s75, 1
        %s167 = scalar_lea.sflag [#allocation4], %s166
        %s168 = sand.u32 %s75, 1
        %s169 = smul.addr %s168, 8
        %s170 = scalar_lea.vmem [#allocation7], %s169
        %s171 = sld [smem:[#allocation2]]
        %s172 = sld [smem:[#allocation2 + $0x1]]
        %s173 = sld [smem:[#allocation2 + $0x2]]
        %v174 = vld [vmem:[%s149] sm:$0xff]
        %v175 = vmax.f32 %v174, 0.0
        %v176 = vstv %s171
        %v177 = vmin.f32 %v175, %v176
        %v178 = vstv %s172
        %v179 = vmul.f32 %v178, %v177
        %v180 = vround.ne.pseudo %v179
        %v181 = vstv %s173
        %v182 = vmul.f32 %v180, %v181
        %183 = vst [vmem:[%s170] sm:$0xff] %v182
        %s184 = sand.u32 %s75, 1
        %s185 = scalar_lea.sflag [#allocation4], %s184
        %s186 = sand.u32 %s75, 1
        %s187 = smul.addr %s186, 8
        %s188 = scalar_lea.vmem [#allocation7], %s187
        // Predicated region
        $region37: #{tpu_custom_call.1} parent=27 // pred_check
          %p189 = pneg %p85
        $region38: #{tpu_custom_call.1} parent=27 // pred_check_branch
          %191 = sbr.rel (%p189) target = $region40
        $region39: #{tpu_custom_call.1} parent=27 // pred_region
          %s193 = ssub.s32 128, 128
          %194 = vsyncadd %s185, %s193
          %s195 = smul.addr %s20, 128
          %s196 = scalar_lea.hbm %s2, %s195
          %s198 = sshll.u32 %s188, 4
          %s199 = int_to_ptr.vmem [resolvable:$true] %s198
          %201 = dma.vmem_to_hbm [thread:$0]  %s199, 128, %s196, %s185
        $region40: #{tpu_custom_call.1} parent=27 // pred_fallthru
          _
      $region28: #{tpu_custom_call.1} parent=5 // pred_fallthru
        _
      %p202 = scmp.le.s32.totalorder 2, %s15
      // Predicated region
      $region41: #{tpu_custom_call.1} parent=5 // pred_check
        %p203 = pneg %p202
      $region42: #{tpu_custom_call.1} parent=5 // pred_check_branch
        %205 = sbr.rel (%p203) target = $region44
      $region43: #{tpu_custom_call.1} parent=5 // pred_region
        %s206 = ssub.s32 %s15, 2
        // Predicated region
        $region45: #{tpu_custom_call.1} parent=43 // pred_check
          %p207 = pneg %p91
        $region46: #{tpu_custom_call.1} parent=43 // pred_check_branch
          %209 = sbr.rel (%p207) target = $region48
        $region47: #{tpu_custom_call.1} parent=43 // pred_region
          %s210 = sand.u32 %s76, 1
          %s211 = scalar_lea.sflag [#allocation4], %s210
          %s212 = sand.u32 %s76, 1
          %s213 = smul.addr %s212, 8
          %s214 = scalar_lea.vmem [#allocation7], %s213
          %215 = dma.done %s211, 128
        $region48: #{tpu_custom_call.1} parent=43 // pred_fallthru
          _
      $region44: #{tpu_custom_call.1} parent=5 // pred_fallthru
        _
    $region6: #{tpu_custom_call.1} parent=1 // loop_footer
      %s19 = sadd.s32 1, %s15
    $region7: #{tpu_custom_call.1} parent=1 // loop_footer_branch
      %14 = sbr.rel target = $region3
    $region8: #{tpu_custom_call.1} parent=1 // loop_exit
      _
    %216 = vsyncpa [#allocation3], 1
    %s217 = scalar_lea.sflag [#allocation3], 1
    %218 = vsyncpa %s217, 1
    %219 = vsyncpa [#allocation4], 1
    %s220 = scalar_lea.sflag [#allocation4], 1
    %221 = vsyncpa %s220, 1
    %222 = vsyncpa [#allocation5], 1
    %s223 = scalar_lea.sflag [#allocation5], 1
    %224 = vsyncpa %s223, 1

</llo_original>
